<compile_context>
chip_gen: v7x
topology: tpu7x:2x2x1
jax: 0.10.0
libtpu: 0.0.40
codegen_flags: <defaults>
</compile_context>

<pallas_src>
import jax
import jax.numpy as jnp
from jax.experimental import pallas as pl
from jax.experimental.pallas import tpu as pltpu


def chained_mm_add_kernel(w_ref, inp_ref, out_ref):
    # wpack tile layout; every tile is a lane-dense (3, 9) block and
    # c = 3*i + j indexes the flattened output position (i, j):
    #   tiles 0..2  : X2R[k][m, c] = x2[k, m]
    #   tiles 3..5  : X1R[k][m, c] = x1[c//3, k]
    #   tiles 6..8  : X4R[l][m, c] = x4[m, l]
    #   tiles 9..11 : X5R[l][m, c] = x5[l, c%3]
    #
    # v1e[m, c] = sum_k x2[k, m] * x1[c//3, k] = (x1 @ x2)[c//3, m]
    v1e = (w_ref[0] * w_ref[3]
           + w_ref[1] * w_ref[4]
           + w_ref[2] * w_ref[5])
    # v2t[m, c] = sum_l x4[m, l] * x5[l, c%3] = (x4 @ x5)[m, c%3]
    v2t = (w_ref[6] * w_ref[9]
           + w_ref[7] * w_ref[10]
           + w_ref[8] * w_ref[11])
    # v3[c] = sum_m v1[c//3, m] * v2[m, c%3] = ((x1@x2) @ (x4@x5))[c//3, c%3]
    v3 = jnp.sum(v1e * v2t, axis=0, keepdims=True)            # (1, 9)
    # out[b, :] = inp[b, :] + v3  -> single lane-dense store.
    out_ref[...] = (inp_ref[...] + v3).astype(out_ref.dtype)


@jax.jit
def model_forward(x1, x2, x4, x5, inp):
    B, M, N = inp.shape            # (3, 3, 3)
    MN = M * N
    f32 = jnp.float32

    # --- pack + pre-replicate the four 3x3 weights into one (12, 3, 9) operand.
    # (Layout plumbing only; eligible for input fusion into the pallas call.)
    x1e = jnp.repeat(x1.T.astype(f32), N, axis=1)            # [k, c] = x1[c//N, k]
    x5e = jnp.tile(x5.astype(f32), (1, M))                   # [l, c] = x5[l, c%N]
    x2r = jnp.broadcast_to(x2.astype(f32)[:, :, None], (M, M, MN))    # [k, m, c] = x2[k, m]
    x1r = jnp.broadcast_to(x1e[:, None, :], (M, M, MN))               # [k, m, c] = x1[c//N, k]
    x4r = jnp.broadcast_to(x4.T.astype(f32)[:, :, None], (M, M, MN))  # [l, m, c] = x4[m, l]
    x5r = jnp.broadcast_to(x5e[:, None, :], (M, M, MN))               # [l, m, c] = x5[l, c%N]
    wpack = jnp.concatenate([x2r, x1r, x4r, x5r], axis=0)             # (12, 3, 9)

    inp_flat = inp.reshape(B, MN)                             # lane-dense (3, 9)

    out_flat = pl.pallas_call(
        chained_mm_add_kernel,
        out_shape=jax.ShapeDtypeStruct((B, MN), inp.dtype),
        # Output reuses inp's buffer (kernel reads inp exactly once).
        input_output_aliases={1: 0},
        compiler_params=pltpu.CompilerParams(
            allow_input_fusion=[True, False]),
        # No grid / no grid_spec: single block, everything resident in VMEM.
    )(wpack, inp_flat)

    return out_flat.reshape(B, M, N)


if __name__ == "__main__":
    key = jax.random.PRNGKey(0)
    k1, k2, k3, k4, k5 = jax.random.split(key, 5)

    # Shapes exactly as in the PyTorch module.
    x1 = jax.random.normal(k1, (3, 3), dtype=jnp.float32)
    x2 = jax.random.normal(k2, (3, 3), dtype=jnp.float32)
    x4 = jax.random.normal(k3, (3, 3), dtype=jnp.float32)
    x5 = jax.random.normal(k4, (3, 3), dtype=jnp.float32)
    inp = jax.random.normal(k5, (3, 3, 3), dtype=jnp.float32)

    out = model_forward(x1, x2, x4, x5, inp)
    out = jax.block_until_ready(out)

    # Reference check (force exact-ish f32 matmuls for the comparison).
    hi = jax.lax.Precision.HIGHEST
    v1 = jnp.dot(x1, x2, precision=hi)
    v2 = jnp.dot(x4, x5, precision=hi)
    ref = jnp.dot(v1, v2, precision=hi) + inp

    assert out.shape == (3, 3, 3)
    assert jnp.allclose(out, ref, atol=1e-5, rtol=1e-5)

    print("KERNEL_OK")
</pallas_src>

<mosaic_0001>
module attributes {stable_mosaic.version = 11 : i64} {
  func.func @chained_mm_add_kernel(%arg0: memref<12x3x9xf32, #tpu.memory_space<vmem>>, %arg1: memref<3x9xf32, #tpu.memory_space<vmem>>, %arg2: memref<3x9xf32, #tpu.memory_space<vmem>>) attributes {dimension_semantics = [], scalar_prefetch = 0 : i64, scratch_operands = 0 : i64, tpu.core_type = #tpu.core_type<tc>} {
    %c0 = arith.constant 0 : index
    %c0_0 = arith.constant 0 : index
    %c0_1 = arith.constant 0 : index
    %0 = vector.load %arg0[%c0, %c0_0, %c0_1] : memref<12x3x9xf32, #tpu.memory_space<vmem>>, vector<1x3x9xf32>
    %1 = vector.shape_cast %0 : vector<1x3x9xf32> to vector<3x9xf32>
    %c3 = arith.constant 3 : index
    %c0_2 = arith.constant 0 : index
    %c0_3 = arith.constant 0 : index
    %2 = vector.load %arg0[%c3, %c0_2, %c0_3] : memref<12x3x9xf32, #tpu.memory_space<vmem>>, vector<1x3x9xf32>
    %3 = vector.shape_cast %2 : vector<1x3x9xf32> to vector<3x9xf32>
    %4 = arith.mulf %1, %3 : vector<3x9xf32>
    %c1 = arith.constant 1 : index
    %c0_4 = arith.constant 0 : index
    %c0_5 = arith.constant 0 : index
    %5 = vector.load %arg0[%c1, %c0_4, %c0_5] : memref<12x3x9xf32, #tpu.memory_space<vmem>>, vector<1x3x9xf32>
    %6 = vector.shape_cast %5 : vector<1x3x9xf32> to vector<3x9xf32>
    %c4 = arith.constant 4 : index
    %c0_6 = arith.constant 0 : index
    %c0_7 = arith.constant 0 : index
    %7 = vector.load %arg0[%c4, %c0_6, %c0_7] : memref<12x3x9xf32, #tpu.memory_space<vmem>>, vector<1x3x9xf32>
    %8 = vector.shape_cast %7 : vector<1x3x9xf32> to vector<3x9xf32>
    %9 = arith.mulf %6, %8 : vector<3x9xf32>
    %10 = arith.addf %4, %9 : vector<3x9xf32>
    %c2 = arith.constant 2 : index
    %c0_8 = arith.constant 0 : index
    %c0_9 = arith.constant 0 : index
    %11 = vector.load %arg0[%c2, %c0_8, %c0_9] : memref<12x3x9xf32, #tpu.memory_space<vmem>>, vector<1x3x9xf32>
    %12 = vector.shape_cast %11 : vector<1x3x9xf32> to vector<3x9xf32>
    %c5 = arith.constant 5 : index
    %c0_10 = arith.constant 0 : index
    %c0_11 = arith.constant 0 : index
    %13 = vector.load %arg0[%c5, %c0_10, %c0_11] : memref<12x3x9xf32, #tpu.memory_space<vmem>>, vector<1x3x9xf32>
    %14 = vector.shape_cast %13 : vector<1x3x9xf32> to vector<3x9xf32>
    %15 = arith.mulf %12, %14 : vector<3x9xf32>
    %16 = arith.addf %10, %15 : vector<3x9xf32>
    %c6 = arith.constant 6 : index
    %c0_12 = arith.constant 0 : index
    %c0_13 = arith.constant 0 : index
    %17 = vector.load %arg0[%c6, %c0_12, %c0_13] : memref<12x3x9xf32, #tpu.memory_space<vmem>>, vector<1x3x9xf32>
    %18 = vector.shape_cast %17 : vector<1x3x9xf32> to vector<3x9xf32>
    %c9 = arith.constant 9 : index
    %c0_14 = arith.constant 0 : index
    %c0_15 = arith.constant 0 : index
    %19 = vector.load %arg0[%c9, %c0_14, %c0_15] : memref<12x3x9xf32, #tpu.memory_space<vmem>>, vector<1x3x9xf32>
    %20 = vector.shape_cast %19 : vector<1x3x9xf32> to vector<3x9xf32>
    %21 = arith.mulf %18, %20 : vector<3x9xf32>
    %c7 = arith.constant 7 : index
    %c0_16 = arith.constant 0 : index
    %c0_17 = arith.constant 0 : index
    %22 = vector.load %arg0[%c7, %c0_16, %c0_17] : memref<12x3x9xf32, #tpu.memory_space<vmem>>, vector<1x3x9xf32>
    %23 = vector.shape_cast %22 : vector<1x3x9xf32> to vector<3x9xf32>
    %c10 = arith.constant 10 : index
    %c0_18 = arith.constant 0 : index
    %c0_19 = arith.constant 0 : index
    %24 = vector.load %arg0[%c10, %c0_18, %c0_19] : memref<12x3x9xf32, #tpu.memory_space<vmem>>, vector<1x3x9xf32>
    %25 = vector.shape_cast %24 : vector<1x3x9xf32> to vector<3x9xf32>
    %26 = arith.mulf %23, %25 : vector<3x9xf32>
    %27 = arith.addf %21, %26 : vector<3x9xf32>
    %c8 = arith.constant 8 : index
    %c0_20 = arith.constant 0 : index
    %c0_21 = arith.constant 0 : index
    %28 = vector.load %arg0[%c8, %c0_20, %c0_21] : memref<12x3x9xf32, #tpu.memory_space<vmem>>, vector<1x3x9xf32>
    %29 = vector.shape_cast %28 : vector<1x3x9xf32> to vector<3x9xf32>
    %c11 = arith.constant 11 : index
    %c0_22 = arith.constant 0 : index
    %c0_23 = arith.constant 0 : index
    %30 = vector.load %arg0[%c11, %c0_22, %c0_23] : memref<12x3x9xf32, #tpu.memory_space<vmem>>, vector<1x3x9xf32>
    %31 = vector.shape_cast %30 : vector<1x3x9xf32> to vector<3x9xf32>
    %32 = arith.mulf %29, %31 : vector<3x9xf32>
    %33 = arith.addf %27, %32 : vector<3x9xf32>
    %34 = arith.mulf %16, %33 : vector<3x9xf32>
    %cst = arith.constant dense<0.000000e+00> : vector<9xf32>
    %35 = vector.multi_reduction <add>, %34, %cst [0] : vector<3x9xf32> to vector<9xf32>
    %36 = vector.shape_cast %35 : vector<9xf32> to vector<1x9xf32>
    %c0_24 = arith.constant 0 : index
    %c0_25 = arith.constant 0 : index
    %37 = vector.load %arg1[%c0_24, %c0_25] : memref<3x9xf32, #tpu.memory_space<vmem>>, vector<3x9xf32>
    %38 = vector.broadcast %36 : vector<1x9xf32> to vector<3x9xf32>
    %39 = arith.addf %37, %38 : vector<3x9xf32>
    %c0_26 = arith.constant 0 : index
    %c0_27 = arith.constant 0 : index
    %40 = vector.load %arg2[%c0_26, %c0_27] : memref<3x9xf32, #tpu.memory_space<vmem>>, vector<3x9xf32>
    tpu.vector_store %arg2[%c0_26, %c0_27], %39 {strides = array<i32>} : memref<3x9xf32, #tpu.memory_space<vmem>>, vector<3x9xf32>,
    return
  }
}

</mosaic_0001>

<llo_original>
// kernel: model_forward.2
$region0: #{model_forward.2}
  #allocation0 [shape = 'u32[]', space=smem, size = 0x4, offset = 0x4, fixed_abs, tag = 'smem constant byte address 0x4 - core index']
  #allocation1 [shape = 'u32[144,128]{1,0:T(1,128)}', space=vmem, size = 0x12000, scoped, tag = 'internal scratch']
  #allocation2 [shape = 'u32[2048]{0}', space=vmem, size = 0x2000, scoped, tag = 'scoped memory for model_forward.2']
  #allocation3 [shape = 'u32[2048]{0}', space=vmem, size = 0x2000, scoped, tag = 'scoped memory for model_forward.2']
  #allocation4 [shape = 'u32[2048]{0}', space=vmem, size = 0x2000, scoped, tag = 'scoped memory for model_forward.2']
  #allocation5 [shape = 'u32[2048]{0}', space=vmem, size = 0x2000, scoped, tag = 'scoped memory for model_forward.2']
  #allocation6 [shape = 'u32[2048]{0}', space=vmem, size = 0x2000, scoped, tag = 'scoped memory for model_forward.2']
  #allocation7 [shape = 'u32[2048]{0}', space=vmem, size = 0x2000, scoped, tag = 'scoped memory for model_forward.2']
  #allocation8 [shape = 'u32[2048]{0}', space=vmem, size = 0x2000, scoped, tag = 'scoped memory for model_forward.2']
  #allocation9 [shape = 'u32[2048]{0}', space=vmem, size = 0x2000, scoped, tag = 'scoped memory for model_forward.2']
  #allocation10 [shape = 'u32[2048]{0}', space=vmem, size = 0x2000, scoped, tag = 'scoped memory for model_forward.2']
  #allocation11 [shape = 'u32[2048]{0}', space=vmem, size = 0x2000, scoped, tag = 'scoped memory for model_forward.2']
  #allocation12 [shape = 'u32[2048]{0}', space=vmem, size = 0x2000, scoped, tag = 'scoped memory for model_forward.2']
  #allocation13 [shape = 'u32[2048]{0}', space=vmem, size = 0x2000, scoped, tag = 'scoped memory for model_forward.2']
  #allocation14 [shape = 'u32[2048]{0}', space=vmem, size = 0x2000, scoped, tag = 'scoped memory for model_forward.2']
  #allocation15 [shape = 'u32[2048]{0}', space=vmem, size = 0x2000, scoped, tag = 'scoped memory for model_forward.2']
  #allocation16 [shape = 'u32[2048]{0}', space=vmem, size = 0x2000, scoped, tag = 'scoped memory for model_forward.2']
  #allocation17 [shape = 'u32[2048]{0}', space=vmem, size = 0x2000, scoped, tag = 'scoped memory for model_forward.2']
  #allocation18 [shape = 'u32[2048]{0}', space=vmem, size = 0x2000, scoped, tag = 'scoped memory for model_forward.2']
  #allocation19 [shape = 'u32[2048]{0}', space=vmem, size = 0x2000, scoped, tag = 'scoped memory for model_forward.2']
  #allocation20 [shape = 'u32[2048]{0}', space=vmem, size = 0x2000, scoped, tag = 'scoped memory for model_forward.2']
  #allocation21 [shape = 'u32[2048]{0}', space=vmem, size = 0x2000, scoped, tag = 'scoped memory for model_forward.2']
  %s0 = inlined_call_operand.vmem [shape: f32[3,9], index: 0, kind: input, shape index: {}, may-alias: {0,6}]
  %s1 = inlined_call_operand.vmem [shape: f32[3,3,9], index: 1, kind: input, shape index: {}]
  %s2 = inlined_call_operand.<no memory space> [shape: f32[], index: 2, kind: input, shape index: {}]
  %s3 = inlined_call_operand.vmem [shape: f32[3,3,9], index: 3, kind: input, shape index: {}]
  %s4 = inlined_call_operand.vmem [shape: f32[3,3,9], index: 4, kind: input, shape index: {}]
  %s5 = inlined_call_operand.vmem [shape: f32[3,3,9], index: 5, kind: input, shape index: {}]
  %s6 = inlined_call_operand.vmem [shape: f32[3,9], index: 6, kind: output, shape index: {}, may-alias: {0,6}]
  %s7 = sld [smem:[#allocation0]]
  $region30: #{model_forward.2} parent=0
    _
  %s9 = ssub.s32 1, %s7
  %s10 = scalar_select 0, %s9, %s7
  %v11 = vstv %s2
  %v12 = vstv %s2
  %v13 = vstv %s2
  %v14 = vstv %s2
  $region1: #{model_forward.2} parent=0
    #allocation22 [shape = 'u8[24576]{0}', space=vmem, size = 0x6000, dematerialized = true, scoped, tag = 'FusionAdapter Buffer %fusion.1 = f32[12,3,9]{2,1,0:T(4,128)} fusion(%param_1.6, %param_2.3, %param_3.4, %param_4.5, %param_5.2), kind=kLoop, calls=%fused_computation.1.clone, metadata={op_name="jit(model_forward)/concatenate" stack_frame_id=16}']
    // Predicated region
    $region2: #{model_forward.2} parent=1 // pred_check
      _
    $region3: #{model_forward.2} parent=1 // pred_check_branch
      %16 = sbr.rel (0) target = $region5
    $region4: #{model_forward.2} parent=1 // pred_region
      %s17 = scalar_lea.vmem %s1, 4294967260
    $region5: #{model_forward.2} parent=1 // pred_fallthru
      _
    // Predicated region
    $region6: #{model_forward.2} parent=1 // pred_check
      _
    $region7: #{model_forward.2} parent=1 // pred_check_branch
      %19 = sbr.rel (0) target = $region9
    $region8: #{model_forward.2} parent=1 // pred_region
      %s20 = scalar_lea.vmem %s3, 4294967272
    $region9: #{model_forward.2} parent=1 // pred_fallthru
      _
    // Predicated region
    $region10: #{model_forward.2} parent=1 // pred_check
      _
    $region11: #{model_forward.2} parent=1 // pred_check_branch
      %22 = sbr.rel (0) target = $region13
    $region12: #{model_forward.2} parent=1 // pred_region
      %s23 = scalar_lea.vmem %s4, 4294967284
    $region13: #{model_forward.2} parent=1 // pred_fallthru
      _
    // Predicated region
    $region14: #{model_forward.2} parent=1 // pred_check
      _
    $region15: #{model_forward.2} parent=1 // pred_check_branch
      %25 = sbr.rel (0) target = $region17
    $region16: #{model_forward.2} parent=1 // pred_region
      _
    $region17: #{model_forward.2} parent=1 // pred_fallthru
      _
    // Predicated region
    $region18: #{model_forward.2} parent=1 // pred_check
      _
    $region19: #{model_forward.2} parent=1 // pred_check_branch
      %27 = sbr.rel (0) target = $region21
    $region20: #{model_forward.2} parent=1 // pred_region
      _
    $region21: #{model_forward.2} parent=1 // pred_fallthru
      _
    %s28 = scalar_lea.vmem %s1, 4294967260
    %s29 = scalar_lea.vmem %s3, 4294967272
    %s30 = scalar_lea.vmem %s4, 4294967284
    %s31 = scalar_lea.vmem %s1, 4294967260
    %s32 = scalar_lea.vmem %s3, 4294967272
    %s33 = scalar_lea.vmem %s4, 4294967284
    %v34 = vld [vmem:[%s5] sm:$0x7]
    %v35 = vlaneseq
    %v36 = vshrl.u32 %v35, 7
    %vm38 = vcmp.lt.s32.totalorder %v36, 3
    %v39 = vsel %vm38, %v34, %v14
    %v40 = vlaneseq
    %v41 = vand.u32 %v40, 127
    %vm43 = vcmp.lt.s32.totalorder %v41, 9
    %v44 = vsel %vm43, %v39, %v14
    %45 = xla_tuple %v44, %v13
    %46 = xla_tuple %45
    %v47 = vmax.f32 %v44, %v13
    %48 = xla_tuple %v47
    %49 = xla_tuple %v47, %v12
    %50 = xla_tuple %49
    %v51 = vmax.f32 %v47, %v12
    %52 = xla_tuple %v51
    %53 = xla_tuple %v51, %v11
    %54 = xla_tuple %53
    %v55 = vmax.f32 %v51, %v11
    %56 = xla_tuple %v55
    %58 = vst [vmem:[#allocation22] sm:$0xf] %v55
    %s59 = scalar_lea.vmem %s31, 4
    %s60 = scalar_lea.vmem %s32, 4
    %s61 = scalar_lea.vmem %s33, 4
    %s62 = scalar_lea.vmem %s5, 4
    %v63 = vld [vmem:[%s62] sm:$0x7]
    %v64 = vlaneseq
    %v65 = vshrl.u32 %v64, 7
    %vm67 = vcmp.lt.s32.totalorder %v65, 3
    %v68 = vsel %vm67, %v63, %v14
    %v69 = vlaneseq
    %v70 = vand.u32 %v69, 127
    %vm72 = vcmp.lt.s32.totalorder %v70, 9
    %v73 = vsel %vm72, %v68, %v14
    %74 = xla_tuple %v73, %v13
    %75 = xla_tuple %74
    %v76 = vmax.f32 %v73, %v13
    %77 = xla_tuple %v76
    %78 = xla_tuple %v76, %v12
    %79 = xla_tuple %78
    %v80 = vmax.f32 %v76, %v12
    %81 = xla_tuple %v80
    %82 = xla_tuple %v80, %v11
    %83 = xla_tuple %82
    %v84 = vmax.f32 %v80, %v11
    %85 = xla_tuple %v84
    %s86 = scalar_lea.vmem [#allocation22], 4
    %88 = vst [vmem:[%s86] sm:$0xf] %v84
    %s89 = scalar_lea.vmem %s31, 8
    %s90 = scalar_lea.vmem %s32, 8
    %s91 = scalar_lea.vmem %s33, 8
    %s92 = scalar_lea.vmem %s5, 8
    %v93 = vld [vmem:[%s92] sm:$0x7]
    %v94 = vlaneseq
    %v95 = vshrl.u32 %v94, 7
    %vm97 = vcmp.lt.s32.totalorder %v95, 3
    %v98 = vsel %vm97, %v93, %v14
    %v99 = vlaneseq
    %v100 = vand.u32 %v99, 127
    %vm102 = vcmp.lt.s32.totalorder %v100, 9
    %v103 = vsel %vm102, %v98, %v14
    %104 = xla_tuple %v103, %v13
    %105 = xla_tuple %104
    %v106 = vmax.f32 %v103, %v13
    %107 = xla_tuple %v106
    %108 = xla_tuple %v106, %v12
    %109 = xla_tuple %108
    %v110 = vmax.f32 %v106, %v12
    %111 = xla_tuple %v110
    %112 = xla_tuple %v110, %v11
    %113 = xla_tuple %112
    %v114 = vmax.f32 %v110, %v11
    %115 = xla_tuple %v114
    %s116 = scalar_lea.vmem [#allocation22], 8
    %118 = vst [vmem:[%s116] sm:$0xf] %v114
    %s119 = scalar_lea.vmem %s31, 12
    %s120 = scalar_lea.vmem %s32, 12
    %s121 = scalar_lea.vmem %s33, 12
    %v122 = vld [vmem:[%s121] sm:$0x7]
    %v123 = vlaneseq
    %v124 = vshrl.u32 %v123, 7
    %vm126 = vcmp.lt.s32.totalorder %v124, 3
    %v127 = vsel %vm126, %v122, %v13
    %v128 = vlaneseq
    %v129 = vand.u32 %v128, 127
    %vm131 = vcmp.lt.s32.totalorder %v129, 9
    %v132 = vsel %vm131, %v127, %v13
    %133 = xla_tuple %v14, %v132
    %134 = xla_tuple %133
    %v135 = vmax.f32 %v14, %v132
    %136 = xla_tuple %v135
    %137 = xla_tuple %v135, %v12
    %138 = xla_tuple %137
    %v139 = vmax.f32 %v135, %v12
    %140 = xla_tuple %v139
    %141 = xla_tuple %v139, %v11
    %142 = xla_tuple %141
    %v143 = vmax.f32 %v139, %v11
    %144 = xla_tuple %v143
    %s145 = scalar_lea.vmem [#allocation22], 12
    %147 = vst [vmem:[%s145] sm:$0xf] %v143
    %s148 = scalar_lea.vmem %s31, 16
    %s149 = scalar_lea.vmem %s32, 16
    %s150 = scalar_lea.vmem %s33, 16
    %v151 = vld [vmem:[%s150] sm:$0x7]
    %v152 = vlaneseq
    %v153 = vshrl.u32 %v152, 7
    %vm155 = vcmp.lt.s32.totalorder %v153, 3
    %v156 = vsel %vm155, %v151, %v13
    %v157 = vlaneseq
    %v158 = vand.u32 %v157, 127
    %vm160 = vcmp.lt.s32.totalorder %v158, 9
    %v161 = vsel %vm160, %v156, %v13
    %162 = xla_tuple %v14, %v161
    %163 = xla_tuple %162
    %v164 = vmax.f32 %v14, %v161
    %165 = xla_tuple %v164
    %166 = xla_tuple %v164, %v12
    %167 = xla_tuple %166
    %v168 = vmax.f32 %v164, %v12
    %169 = xla_tuple %v168
    %170 = xla_tuple %v168, %v11
    %171 = xla_tuple %170
    %v172 = vmax.f32 %v168, %v11
    %173 = xla_tuple %v172
    %s174 = scalar_lea.vmem [#allocation22], 16
    %176 = vst [vmem:[%s174] sm:$0xf] %v172
    %s177 = scalar_lea.vmem %s31, 20
    %s178 = scalar_lea.vmem %s32, 20
    %s179 = scalar_lea.vmem %s33, 20
    %v180 = vld [vmem:[%s179] sm:$0x7]
    %v181 = vlaneseq
    %v182 = vshrl.u32 %v181, 7
    %vm184 = vcmp.lt.s32.totalorder %v182, 3
    %v185 = vsel %vm184, %v180, %v13
    %v186 = vlaneseq
    %v187 = vand.u32 %v186, 127
    %vm189 = vcmp.lt.s32.totalorder %v187, 9
    %v190 = vsel %vm189, %v185, %v13
    %191 = xla_tuple %v14, %v190
    %192 = xla_tuple %191
    %v193 = vmax.f32 %v14, %v190
    %194 = xla_tuple %v193
    %195 = xla_tuple %v193, %v12
    %196 = xla_tuple %195
    %v197 = vmax.f32 %v193, %v12
    %198 = xla_tuple %v197
    %199 = xla_tuple %v197, %v11
    %200 = xla_tuple %199
    %v201 = vmax.f32 %v197, %v11
    %202 = xla_tuple %v201
    %s203 = scalar_lea.vmem [#allocation22], 20
    %205 = vst [vmem:[%s203] sm:$0xf] %v201
    %s206 = scalar_lea.vmem %s31, 24
    %s207 = scalar_lea.vmem %s32, 24
    %v208 = vld [vmem:[%s207] sm:$0x7]
    %v209 = vlaneseq
    %v210 = vshrl.u32 %v209, 7
    %vm212 = vcmp.lt.s32.totalorder %v210, 3
    %v213 = vsel %vm212, %v208, %v12
    %v214 = vlaneseq
    %v215 = vand.u32 %v214, 127
    %vm217 = vcmp.lt.s32.totalorder %v215, 9
    %v218 = vsel %vm217, %v213, %v12
    %219 = xla_tuple %v14, %v13
    %220 = xla_tuple %219
    %v221 = vmax.f32 %v14, %v13
    %222 = xla_tuple %v221
    %223 = xla_tuple %v221, %v218
    %224 = xla_tuple %223
    %v225 = vmax.f32 %v221, %v218
    %226 = xla_tuple %v225
    %227 = xla_tuple %v225, %v11
    %228 = xla_tuple %227
    %v229 = vmax.f32 %v225, %v11
    %230 = xla_tuple %v229
    %s231 = scalar_lea.vmem [#allocation22], 24
    %233 = vst [vmem:[%s231] sm:$0xf] %v229
    %s234 = scalar_lea.vmem %s31, 28
    %s235 = scalar_lea.vmem %s32, 28
    %v236 = vld [vmem:[%s235] sm:$0x7]
    %v237 = vlaneseq
    %v238 = vshrl.u32 %v237, 7
    %vm240 = vcmp.lt.s32.totalorder %v238, 3
    %v241 = vsel %vm240, %v236, %v12
    %v242 = vlaneseq
    %v243 = vand.u32 %v242, 127
    %vm245 = vcmp.lt.s32.totalorder %v243, 9
    %v246 = vsel %vm245, %v241, %v12
    %247 = xla_tuple %v14, %v13
    %248 = xla_tuple %247
    %v249 = vmax.f32 %v14, %v13
    %250 = xla_tuple %v249
    %251 = xla_tuple %v249, %v246
    %252 = xla_tuple %251
    %v253 = vmax.f32 %v249, %v246
    %254 = xla_tuple %v253
    %255 = xla_tuple %v253, %v11
    %256 = xla_tuple %255
    %v257 = vmax.f32 %v253, %v11
    %258 = xla_tuple %v257
    %s259 = scalar_lea.vmem [#allocation22], 28
    %261 = vst [vmem:[%s259] sm:$0xf] %v257
    %s262 = scalar_lea.vmem %s31, 32
    %s263 = scalar_lea.vmem %s32, 32
    %v264 = vld [vmem:[%s263] sm:$0x7]
    %v265 = vlaneseq
    %v266 = vshrl.u32 %v265, 7
    %vm268 = vcmp.lt.s32.totalorder %v266, 3
    %v269 = vsel %vm268, %v264, %v12
    %v270 = vlaneseq
    %v271 = vand.u32 %v270, 127
    %vm273 = vcmp.lt.s32.totalorder %v271, 9
    %v274 = vsel %vm273, %v269, %v12
    %275 = xla_tuple %v14, %v13
    %276 = xla_tuple %275
    %v277 = vmax.f32 %v14, %v13
    %278 = xla_tuple %v277
    %279 = xla_tuple %v277, %v274
    %280 = xla_tuple %279
    %v281 = vmax.f32 %v277, %v274
    %282 = xla_tuple %v281
    %283 = xla_tuple %v281, %v11
    %284 = xla_tuple %283
    %v285 = vmax.f32 %v281, %v11
    %286 = xla_tuple %v285
    %s287 = scalar_lea.vmem [#allocation22], 32
    %289 = vst [vmem:[%s287] sm:$0xf] %v285
    %s290 = scalar_lea.vmem %s31, 36
    %v291 = vld [vmem:[%s290] sm:$0x7]
    %v292 = vlaneseq
    %v293 = vshrl.u32 %v292, 7
    %vm295 = vcmp.lt.s32.totalorder %v293, 3
    %v296 = vsel %vm295, %v291, %v11
    %v297 = vlaneseq
    %v298 = vand.u32 %v297, 127
    %vm300 = vcmp.lt.s32.totalorder %v298, 9
    %v301 = vsel %vm300, %v296, %v11
    %302 = xla_tuple %v14, %v13
    %303 = xla_tuple %302
    %v304 = vmax.f32 %v14, %v13
    %305 = xla_tuple %v304
    %306 = xla_tuple %v304, %v12
    %307 = xla_tuple %306
    %v308 = vmax.f32 %v304, %v12
    %309 = xla_tuple %v308
    %310 = xla_tuple %v308, %v301
    %311 = xla_tuple %310
    %v312 = vmax.f32 %v308, %v301
    %313 = xla_tuple %v312
    %s314 = scalar_lea.vmem [#allocation22], 36
    %316 = vst [vmem:[%s314] sm:$0xf] %v312
    %s317 = scalar_lea.vmem %s31, 40
    %v318 = vld [vmem:[%s317] sm:$0x7]
    %v319 = vlaneseq
    %v320 = vshrl.u32 %v319, 7
    %vm322 = vcmp.lt.s32.totalorder %v320, 3
    %v323 = vsel %vm322, %v318, %v11
    %v324 = vlaneseq
    %v325 = vand.u32 %v324, 127
    %vm327 = vcmp.lt.s32.totalorder %v325, 9
    %v328 = vsel %vm327, %v323, %v11
    %329 = xla_tuple %v14, %v13
    %330 = xla_tuple %329
    %v331 = vmax.f32 %v14, %v13
    %332 = xla_tuple %v331
    %333 = xla_tuple %v331, %v12
    %334 = xla_tuple %333
    %v335 = vmax.f32 %v331, %v12
    %336 = xla_tuple %v335
    %337 = xla_tuple %v335, %v328
    %338 = xla_tuple %337
    %v339 = vmax.f32 %v335, %v328
    %340 = xla_tuple %v339
    %s341 = scalar_lea.vmem [#allocation22], 40
    %343 = vst [vmem:[%s341] sm:$0xf] %v339
    %s344 = scalar_lea.vmem %s31, 44
    %v345 = vld [vmem:[%s344] sm:$0x7]
    %v346 = vlaneseq
    %v347 = vshrl.u32 %v346, 7
    %vm349 = vcmp.lt.s32.totalorder %v347, 3
    %v350 = vsel %vm349, %v345, %v11
    %v351 = vlaneseq
    %v352 = vand.u32 %v351, 127
    %vm354 = vcmp.lt.s32.totalorder %v352, 9
    %v355 = vsel %vm354, %v350, %v11
    %356 = xla_tuple %v14, %v13
    %357 = xla_tuple %356
    %v358 = vmax.f32 %v14, %v13
    %359 = xla_tuple %v358
    %360 = xla_tuple %v358, %v12
    %361 = xla_tuple %360
    %v362 = vmax.f32 %v358, %v12
    %363 = xla_tuple %v362
    %364 = xla_tuple %v362, %v355
    %365 = xla_tuple %364
    %v366 = vmax.f32 %v362, %v355
    %367 = xla_tuple %v366
    %s368 = scalar_lea.vmem [#allocation22], 44
    %370 = vst [vmem:[%s368] sm:$0xf] %v366
    %v371 = vld [vmem:[#allocation22] sm:$0x7]
    %s372 = scalar_lea.vmem [#allocation22], 12
    %v373 = vld [vmem:[%s372] sm:$0x7]
    %v374 = vmul.f32 %v371, %v373
    %s375 = scalar_lea.vmem [#allocation22], 4
    %v376 = vld [vmem:[%s375] sm:$0x7]
    %s377 = scalar_lea.vmem [#allocation22], 16
    %v378 = vld [vmem:[%s377] sm:$0x7]
    %v379 = vmul.f32 %v376, %v378
    %v380 = vadd.f32 %v374, %v379
    %s381 = scalar_lea.vmem [#allocation22], 8
    %v382 = vld [vmem:[%s381] sm:$0x7]
    %s383 = scalar_lea.vmem [#allocation22], 20
    %v384 = vld [vmem:[%s383] sm:$0x7]
    %v385 = vmul.f32 %v382, %v384
    %v386 = vadd.f32 %v380, %v385
    %s387 = scalar_lea.vmem [#allocation22], 24
    %v388 = vld [vmem:[%s387] sm:$0x7]
    %s389 = scalar_lea.vmem [#allocation22], 36
    %v390 = vld [vmem:[%s389] sm:$0x7]
    %v391 = vmul.f32 %v388, %v390
    %s392 = scalar_lea.vmem [#allocation22], 28
    %v393 = vld [vmem:[%s392] sm:$0x7]
    %s394 = scalar_lea.vmem [#allocation22], 40
    %v395 = vld [vmem:[%s394] sm:$0x7]
    %v396 = vmul.f32 %v393, %v395
    %v397 = vadd.f32 %v391, %v396
    %s398 = scalar_lea.vmem [#allocation22], 32
    %v399 = vld [vmem:[%s398] sm:$0x7]
    %s400 = scalar_lea.vmem [#allocation22], 44
    %v401 = vld [vmem:[%s400] sm:$0x7]
    %v402 = vmul.f32 %v399, %v401
    %v403 = vadd.f32 %v397, %v402
    %v404 = vmul.f32 %v386, %v403
    %vm405 = vcmask 67584
    %v406 = vsel %vm405, %v404, 0.0
    %v407 = vrot.slane %v406, 4
    %v408 = vadd.f32 %v406, %v407
    %v409 = vrot.slane %v408, 2
    %v410 = vadd.f32 %v408, %v409
    %v411 = vrot.slane %v410, 1
    %v412 = vadd.f32 %v410, %v411
    %v413 = vld [vmem:[%s0] sm:$0x7]
    %v414 = vadd.f32 %v413, %v412
    %415 = vst.msk [vmem:[%s6] sm:$0x7] %vm405, %v414
    // Predicated region
    $region22: #{model_forward.2} parent=1 // pred_check
      _
    $region23: #{model_forward.2} parent=1 // pred_check_branch
      %417 = sbr.rel (0) target = $region25
    $region24: #{model_forward.2} parent=1 // pred_region
      _
    $region25: #{model_forward.2} parent=1 // pred_fallthru
      _
    // Predicated region
    $region26: #{model_forward.2} parent=1 // pred_check
      _
    $region27: #{model_forward.2} parent=1 // pred_check_branch
      %419 = sbr.rel (0) target = $region29
    $region28: #{model_forward.2} parent=1 // pred_region
      _
    $region29: #{model_forward.2} parent=1 // pred_fallthru
      _

</llo_original>
